<compile_context>
chip_gen: v7x
topology: tpu7x:2x2x1
jax: 0.10.0
libtpu: 0.0.40
codegen_flags: <defaults>
</compile_context>

<pallas_src>
import jax
import jax.numpy as jnp
from jax.experimental import pallas as pl
from jax.experimental.pallas import tpu as pltpu


# --------------------------------------------------------------------------- #
# Kernel
# --------------------------------------------------------------------------- #
def intent_classifier_kernel(cls_ref, wt_ref, bt_ref, wb_ref, bb_ref, logits_ref):
    """One batch tile:  logits = ReLU(x @ Wt + bt) @ Wb + bb   (BN pre-folded)."""
    x = cls_ref[...]                                               # [TB, Dp] bf16
    m = jnp.dot(x, wt_ref[...],
                preferred_element_type=jnp.float32) + bt_ref[...]  # [TB, Hp] f32
    m = jnp.maximum(m, 0.0)                                        # ReLU in f32
    logits = jnp.dot(m.astype(wb_ref.dtype), wb_ref[...],
                     preferred_element_type=jnp.float32) + bb_ref[...]
    logits_ref[...] = logits.astype(logits_ref.dtype)              # [TB, Tp]


# --------------------------------------------------------------------------- #
# Helpers
# --------------------------------------------------------------------------- #
def _round_up(x, m):
    return (x + m - 1) // m * m


def _pick_tb(B, *, max_tb=256, min_steps=2):
    """Fill the MXU M dimension, but keep >= 2 grid steps when B allows it so the
    two TensorCores on v7x each take half the batch (grid axis is "parallel")."""
    if B <= 16:
        return _round_up(B, 8)
    tb = _round_up(pl.cdiv(B, min_steps), 16)
    return min(max_tb, tb)


# --------------------------------------------------------------------------- #
# One-time parameter prep (BN fold + padding + bf16 cast) — OUT of the hot path
# --------------------------------------------------------------------------- #
def fold_bn(raw):
    """Fold eval-mode BatchNorm1d into the preceding Linear:  BN(xW+b) = xW' + b'."""
    scale = raw["gamma"] / jnp.sqrt(raw["rvar"] + raw["eps"])        # [1, H]
    wt_f = raw["wt"] * scale                                         # [D, H]
    bt_f = (raw["bt"] - raw["rmean"]) * scale + raw["beta"]          # [1, H]
    return dict(wt=wt_f, bt=bt_f, wb=raw["wb"], bb=raw["bb"])


def prepare_params(raw):
    """BN-fold, pad to lane multiples of 128, cast matmul operands to bf16.

    Zero padding is exact for this network: padded input cols hit zero weight
    rows; padded hidden cols are ReLU(0)=0 feeding zero Wb rows; padded logit
    cols are sliced off in the wrapper.
    """
    folded = fold_bn(raw)
    D, H = folded["wt"].shape
    T = folded["wb"].shape[1]
    Dp, Hp, Tp = _round_up(D, 128), _round_up(H, 128), _round_up(T, 128)

    wt_p = jnp.zeros((Dp, Hp), jnp.bfloat16).at[:D, :H].set(folded["wt"].astype(jnp.bfloat16))
    bt_p = jnp.zeros((1, Hp), jnp.float32).at[:, :H].set(folded["bt"])
    wb_p = jnp.zeros((Hp, Tp), jnp.bfloat16).at[:H, :T].set(folded["wb"].astype(jnp.bfloat16))
    bb_p = jnp.zeros((1, Tp), jnp.float32).at[:, :T].set(folded["bb"])

    return dict(wt_p=wt_p, bt_p=bt_p, wb_p=wb_p, bb_p=bb_p,
                D=D, H=H, T=T, Dp=Dp, Hp=Hp, Tp=Tp)


# --------------------------------------------------------------------------- #
# Hot-path forward
# --------------------------------------------------------------------------- #
def intent_forward(cls_emb, prepped, *, tb=None, out_dtype=jnp.bfloat16):
    """cls_emb: [B, embed_dim] f32.  prepped: output of prepare_params()."""
    B, D = cls_emb.shape
    assert D == prepped["D"], (D, prepped["D"])
    Dp, Hp, Tp, T = prepped["Dp"], prepped["Hp"], prepped["Tp"], prepped["T"]

    if tb is None:
        tb = _pick_tb(B)
    Bp = _round_up(B, tb)
    grid = (Bp // tb,)

    # Activations: plain bf16 cast when already aligned; pad only if needed.
    x = cls_emb.astype(jnp.bfloat16)
    if (Bp, Dp) != (B, D):
        x = jnp.zeros((Bp, Dp), jnp.bfloat16).at[:B, :D].set(x)

    # Right-sized VMEM request (double-buffered batch blocks + weights + slack).
    out_itemsize = jnp.dtype(out_dtype).itemsize
    weight_bytes = Dp * Hp * 2 + Hp * Tp * 2 + Hp * 4 + Tp * 4
    block_bytes = 2 * (tb * Dp * 2 + tb * Tp * out_itemsize)
    vmem_limit = min(32 << 20,
                     max(4 << 20,
                         _round_up(2 * weight_bytes + block_bytes + (1 << 20), 1 << 20)))

    flops = 2 * Bp * (Dp * Hp + Hp * Tp)
    bytes_accessed = (Bp * Dp * 2 + weight_bytes + Bp * Tp * out_itemsize)
    cost = pl.CostEstimate(flops=flops, transcendentals=0, bytes_accessed=bytes_accessed)

    def build_in_specs(single_buffer_weights):
        if single_buffer_weights:
            def const_spec(shape):
                return pl.BlockSpec(shape, lambda i: (0,) * len(shape),
                                    pipeline_mode=pl.Buffered(1))
        else:
            def const_spec(shape):
                return pl.BlockSpec(shape, lambda i: (0,) * len(shape))
        return [
            pl.BlockSpec((tb, Dp), lambda i: (i, 0)),   # cls: tiled over batch
            const_spec((Dp, Hp)),                       # Wt (BN folded), resident
            const_spec((1, Hp)),                        # bt (BN folded), resident
            const_spec((Hp, Tp)),                       # Wb, resident
            const_spec((1, Tp)),                        # bb, resident
        ]

    def run(single_buffer_weights):
        return pl.pallas_call(
            intent_classifier_kernel,
            out_shape=jax.ShapeDtypeStruct((Bp, Tp), out_dtype),
            grid=grid,
            in_specs=build_in_specs(single_buffer_weights),
            out_specs=pl.BlockSpec((tb, Tp), lambda i: (i, 0)),
            compiler_params=pltpu.CompilerParams(
                dimension_semantics=("parallel",),
                vmem_limit_bytes=vmem_limit,
            ),
            cost_estimate=cost,
        )(x, prepped["wt_p"], prepped["bt_p"], prepped["wb_p"], prepped["bb_p"])

    try:
        # Weights/biases have constant index maps (fetched once) — single buffer
        # halves their VMEM reservation (matters at BERT-scale dims on v7x).
        logits_p = run(single_buffer_weights=True)
    except Exception:
        # This JAX build rejects pipeline_mode=Buffered(1); use default buffering.
        logits_p = run(single_buffer_weights=False)

    return logits_p[:B, :T].astype(jnp.float32)


# --------------------------------------------------------------------------- #
# Parameter construction (PyTorch-style) and plain-JAX reference
# --------------------------------------------------------------------------- #
def init_params(key, embed_dim, hidden_dim, target_size):
    """Synthetic params.  Linear weights stored transposed as [in, out]."""
    ks = jax.random.split(key, 5)

    def lin(k, din, dout):
        kw, kb = jax.random.split(k)
        bound = 1.0 / jnp.sqrt(din)
        w = jax.random.uniform(kw, (din, dout), jnp.float32, -bound, bound)
        b = jax.random.uniform(kb, (1, dout), jnp.float32, -bound, bound)
        return w, b

    wt, bt = lin(ks[0], embed_dim, hidden_dim)      # Classifier.top
    wb, bb = lin(ks[1], hidden_dim, target_size)    # Classifier.bottom
    gamma = 1.0 + 0.05 * jax.random.normal(ks[2], (1, hidden_dim), jnp.float32)
    beta = 0.05 * jax.random.normal(ks[3], (1, hidden_dim), jnp.float32)
    rmean = 0.01 * jax.random.normal(ks[4], (1, hidden_dim), jnp.float32)
    rvar = jnp.ones((1, hidden_dim), jnp.float32)
    return dict(wt=wt, bt=bt, wb=wb, bb=bb,
                gamma=gamma, beta=beta, rmean=rmean, rvar=rvar, eps=1e-5)


def reference_forward(cls_emb, raw):
    """Plain-JAX f32 reference matching the PyTorch module in eval mode."""
    h = cls_emb @ raw["wt"] + raw["bt"]
    h = (h - raw["rmean"]) / jnp.sqrt(raw["rvar"] + raw["eps"]) * raw["gamma"] + raw["beta"]
    h = jnp.maximum(h, 0.0)
    return h @ raw["wb"] + raw["bb"]


# --------------------------------------------------------------------------- #
if __name__ == "__main__":
    # Small shapes consistent with the module: CLS embedding dim, hidden, targets.
    B, EMBED_DIM, HIDDEN_DIM, TARGET_SIZE = 32, 256, 128, 16

    key = jax.random.PRNGKey(0)
    k_x, k_p = jax.random.split(key)
    cls_emb = jax.random.normal(k_x, (B, EMBED_DIM), jnp.float32)
    raw = init_params(k_p, EMBED_DIM, HIDDEN_DIM, TARGET_SIZE)

    prepped = prepare_params(raw)          # one-time: BN fold + pad + bf16 cast

    logits = intent_forward(cls_emb, prepped)   # auto tb: 16 -> 2 parallel steps
    jax.block_until_ready(logits)

    logits_ref = reference_forward(cls_emb, raw)
    assert logits.shape == (B, TARGET_SIZE), logits.shape
    # bf16 matmul operands + bf16 logits vs f32 reference -> loosened tolerance.
    assert jnp.allclose(logits, logits_ref, atol=3e-2, rtol=3e-2), (
        float(jnp.max(jnp.abs(logits - logits_ref))))

    print("KERNEL_OK")
</pallas_src>

<mosaic_0001>
module attributes {stable_mosaic.version = 11 : i64} {
  func.func @intent_classifier_kernel(%arg0: i32, %arg1: memref<16x256xbf16, #tpu.memory_space<vmem>>, %arg2: memref<256x128xbf16, #tpu.memory_space<vmem>>, %arg3: memref<1x128xf32, #tpu.memory_space<vmem>>, %arg4: memref<128x128xbf16, #tpu.memory_space<vmem>>, %arg5: memref<1x128xf32, #tpu.memory_space<vmem>>, %arg6: memref<16x128xbf16, #tpu.memory_space<vmem>>) attributes {dimension_semantics = [#tpu.dimension_semantics<parallel>], iteration_bounds = array<i64: 2>, scalar_prefetch = 0 : i64, scratch_operands = 0 : i64, tpu.core_type = #tpu.core_type<tc>, window_params = [{transform_indices = @transform_0, window_bounds = array<i64: 16, 256>}, {pipeline_mode = #tpu.pipeline_mode<synchronous>, transform_indices = @transform_1, window_bounds = array<i64: 256, 128>}, {pipeline_mode = #tpu.pipeline_mode<synchronous>, transform_indices = @transform_2, window_bounds = array<i64: 1, 128>}, {pipeline_mode = #tpu.pipeline_mode<synchronous>, transform_indices = @transform_3, window_bounds = array<i64: 128, 128>}, {pipeline_mode = #tpu.pipeline_mode<synchronous>, transform_indices = @transform_4, window_bounds = array<i64: 1, 128>}, {transform_indices = @transform_5, window_bounds = array<i64: 16, 128>}]} {
    %c0 = arith.constant 0 : index
    %c0_0 = arith.constant 0 : index
    %0 = vector.load %arg1[%c0, %c0_0] : memref<16x256xbf16, #tpu.memory_space<vmem>>, vector<16x256xbf16>
    %c0_1 = arith.constant 0 : index
    %c0_2 = arith.constant 0 : index
    %1 = vector.load %arg2[%c0_1, %c0_2] : memref<256x128xbf16, #tpu.memory_space<vmem>>, vector<256x128xbf16>
    %cst = arith.constant dense<0.000000e+00> : vector<16x128xf32>
    %2 = tpu.matmul %0, %1, %cst {dimension_numbers = #tpu.dot_dimension_numbers<[1], [0], [0], [1], [0, 0, 1, 1], [], []>} : vector<16x256xbf16>, vector<256x128xbf16>, vector<16x128xf32> -> vector<16x128xf32>
    %c0_3 = arith.constant 0 : index
    %c0_4 = arith.constant 0 : index
    %3 = vector.load %arg3[%c0_3, %c0_4] : memref<1x128xf32, #tpu.memory_space<vmem>>, vector<1x128xf32>
    %4 = vector.broadcast %3 : vector<1x128xf32> to vector<16x128xf32>
    %5 = arith.addf %2, %4 : vector<16x128xf32>
    %cst_5 = arith.constant 0.000000e+00 : f32
    %6 = vector.broadcast %cst_5 : f32 to vector<16x128xf32>
    %7 = arith.maximumf %5, %6 : vector<16x128xf32>
    %8 = arith.truncf %7 : vector<16x128xf32> to vector<16x128xbf16>
    %c0_6 = arith.constant 0 : index
    %c0_7 = arith.constant 0 : index
    %9 = vector.load %arg4[%c0_6, %c0_7] : memref<128x128xbf16, #tpu.memory_space<vmem>>, vector<128x128xbf16>
    %cst_8 = arith.constant dense<0.000000e+00> : vector<16x128xf32>
    %10 = tpu.matmul %8, %9, %cst_8 {dimension_numbers = #tpu.dot_dimension_numbers<[1], [0], [0], [1], [0, 0, 1, 1], [], []>} : vector<16x128xbf16>, vector<128x128xbf16>, vector<16x128xf32> -> vector<16x128xf32>
    %c0_9 = arith.constant 0 : index
    %c0_10 = arith.constant 0 : index
    %11 = vector.load %arg5[%c0_9, %c0_10] : memref<1x128xf32, #tpu.memory_space<vmem>>, vector<1x128xf32>
    %12 = vector.broadcast %11 : vector<1x128xf32> to vector<16x128xf32>
    %13 = arith.addf %10, %12 : vector<16x128xf32>
    %14 = arith.truncf %13 : vector<16x128xf32> to vector<16x128xbf16>
    %c0_11 = arith.constant 0 : index
    %c0_12 = arith.constant 0 : index
    %15 = vector.load %arg6[%c0_11, %c0_12] : memref<16x128xbf16, #tpu.memory_space<vmem>>, vector<16x128xbf16>
    tpu.vector_store %arg6[%c0_11, %c0_12], %14 {strides = array<i32>} : memref<16x128xbf16, #tpu.memory_space<vmem>>, vector<16x128xbf16>,
    return
  }
  func.func @transform_0(%arg0: i32) -> (i32, i32) {
    %c0_i32 = arith.constant 0 : i32
    %c0_i32_0 = arith.constant 0 : i32
    return %arg0, %c0_i32 : i32, i32
  }
  func.func @transform_1(%arg0: i32) -> (i32, i32) {
    %c0_i32 = arith.constant 0 : i32
    %c0_i32_0 = arith.constant 0 : i32
    %c0_i32_1 = arith.constant 0 : i32
    return %c0_i32, %c0_i32_0 : i32, i32
  }
  func.func @transform_2(%arg0: i32) -> (i32, i32) {
    %c0_i32 = arith.constant 0 : i32
    %c0_i32_0 = arith.constant 0 : i32
    %c0_i32_1 = arith.constant 0 : i32
    return %c0_i32, %c0_i32_0 : i32, i32
  }
  func.func @transform_3(%arg0: i32) -> (i32, i32) {
    %c0_i32 = arith.constant 0 : i32
    %c0_i32_0 = arith.constant 0 : i32
    %c0_i32_1 = arith.constant 0 : i32
    return %c0_i32, %c0_i32_0 : i32, i32
  }
  func.func @transform_4(%arg0: i32) -> (i32, i32) {
    %c0_i32 = arith.constant 0 : i32
    %c0_i32_0 = arith.constant 0 : i32
    %c0_i32_1 = arith.constant 0 : i32
    return %c0_i32, %c0_i32_0 : i32, i32
  }
  func.func @transform_5(%arg0: i32) -> (i32, i32) {
    %c0_i32 = arith.constant 0 : i32
    %c0_i32_0 = arith.constant 0 : i32
    return %arg0, %c0_i32 : i32, i32
  }
}

module attributes {stable_mosaic.version = 11 : i64} {
  func.func @intent_classifier_kernel(%arg0: i32, %arg1: memref<16x256xbf16, #tpu.memory_space<vmem>>, %arg2: memref<256x128xbf16, #tpu.memory_space<vmem>>, %arg3: memref<1x128xf32, #tpu.memory_space<vmem>>, %arg4: memref<128x128xbf16, #tpu.memory_space<vmem>>, %arg5: memref<1x128xf32, #tpu.memory_space<vmem>>, %arg6: memref<16x128xbf16, #tpu.memory_space<vmem>>) attributes {dimension_semantics = [#tpu.dimension_semantics<parallel>], iteration_bounds = array<i64: 2>, scalar_prefetch = 0 : i64, scratch_operands = 0 : i64, tpu.core_type = #tpu.core_type<tc>, window_params = [{transform_indices = @transform_0, window_bounds = array<i64: 16, 256>}, {pipeline_mode = #tpu.pipeline_mode<synchronous>, transform_indices = @transform_1, window_bounds = array<i64: 256, 128>}, {pipeline_mode = #tpu.pipeline_mode<synchronous>, transform_indices = @transform_2, window_bounds = array<i64: 1, 128>}, {pipeline_mode = #tpu.pipeline_mode<synchronous>, transform_indices = @transform_3, window_bounds = array<i64: 128, 128>}, {pipeline_mode = #tpu.pipeline_mode<synchronous>, transform_indices = @transform_4, window_bounds = array<i64: 1, 128>}, {transform_indices = @transform_5, window_bounds = array<i64: 16, 128>}]} {
    %c0 = arith.constant 0 : index
    %c0_0 = arith.constant 0 : index
    %0 = vector.load %arg1[%c0, %c0_0] : memref<16x256xbf16, #tpu.memory_space<vmem>>, vector<16x256xbf16>
    %c0_1 = arith.constant 0 : index
    %c0_2 = arith.constant 0 : index
    %1 = vector.load %arg2[%c0_1, %c0_2] : memref<256x128xbf16, #tpu.memory_space<vmem>>, vector<256x128xbf16>
    %cst = arith.constant dense<0.000000e+00> : vector<16x128xf32>
    %2 = tpu.matmul %0, %1, %cst {dimension_numbers = #tpu.dot_dimension_numbers<[1], [0], [0], [1], [0, 0, 1, 1], [], []>} : vector<16x256xbf16>, vector<256x128xbf16>, vector<16x128xf32> -> vector<16x128xf32>
    %c0_3 = arith.constant 0 : index
    %c0_4 = arith.constant 0 : index
    %3 = vector.load %arg3[%c0_3, %c0_4] : memref<1x128xf32, #tpu.memory_space<vmem>>, vector<1x128xf32>
    %4 = vector.broadcast %3 : vector<1x128xf32> to vector<16x128xf32>
    %5 = arith.addf %2, %4 : vector<16x128xf32>
    %cst_5 = arith.constant 0.000000e+00 : f32
    %6 = vector.broadcast %cst_5 : f32 to vector<16x128xf32>
    %7 = arith.maximumf %5, %6 : vector<16x128xf32>
    %8 = arith.truncf %7 : vector<16x128xf32> to vector<16x128xbf16>
    %c0_6 = arith.constant 0 : index
    %c0_7 = arith.constant 0 : index
    %9 = vector.load %arg4[%c0_6, %c0_7] : memref<128x128xbf16, #tpu.memory_space<vmem>>, vector<128x128xbf16>
    %cst_8 = arith.constant dense<0.000000e+00> : vector<16x128xf32>
    %10 = tpu.matmul %8, %9, %cst_8 {dimension_numbers = #tpu.dot_dimension_numbers<[1], [0], [0], [1], [0, 0, 1, 1], [], []>} : vector<16x128xbf16>, vector<128x128xbf16>, vector<16x128xf32> -> vector<16x128xf32>
    %c0_9 = arith.constant 0 : index
    %c0_10 = arith.constant 0 : index
    %11 = vector.load %arg5[%c0_9, %c0_10] : memref<1x128xf32, #tpu.memory_space<vmem>>, vector<1x128xf32>
    %12 = vector.broadcast %11 : vector<1x128xf32> to vector<16x128xf32>
    %13 = arith.addf %10, %12 : vector<16x128xf32>
    %14 = arith.truncf %13 : vector<16x128xf32> to vector<16x128xbf16>
    %c0_11 = arith.constant 0 : index
    %c0_12 = arith.constant 0 : index
    %15 = vector.load %arg6[%c0_11, %c0_12] : memref<16x128xbf16, #tpu.memory_space<vmem>>, vector<16x128xbf16>
    tpu.vector_store %arg6[%c0_11, %c0_12], %14 {strides = array<i32>} : memref<16x128xbf16, #tpu.memory_space<vmem>>, vector<16x128xbf16>,
    return
  }
  func.func @transform_0(%arg0: i32) -> (i32, i32) {
    %c0_i32 = arith.constant 0 : i32
    %c0_i32_0 = arith.constant 0 : i32
    return %arg0, %c0_i32 : i32, i32
  }
  func.func @transform_1(%arg0: i32) -> (i32, i32) {
    %c0_i32 = arith.constant 0 : i32
    %c0_i32_0 = arith.constant 0 : i32
    %c0_i32_1 = arith.constant 0 : i32
    return %c0_i32, %c0_i32_0 : i32, i32
  }
  func.func @transform_2(%arg0: i32) -> (i32, i32) {
    %c0_i32 = arith.constant 0 : i32
    %c0_i32_0 = arith.constant 0 : i32
    %c0_i32_1 = arith.constant 0 : i32
    return %c0_i32, %c0_i32_0 : i32, i32
  }
  func.func @transform_3(%arg0: i32) -> (i32, i32) {
    %c0_i32 = arith.constant 0 : i32
    %c0_i32_0 = arith.constant 0 : i32
    %c0_i32_1 = arith.constant 0 : i32
    return %c0_i32, %c0_i32_0 : i32, i32
  }
  func.func @transform_4(%arg0: i32) -> (i32, i32) {
    %c0_i32 = arith.constant 0 : i32
    %c0_i32_0 = arith.constant 0 : i32
    %c0_i32_1 = arith.constant 0 : i32
    return %c0_i32, %c0_i32_0 : i32, i32
  }
  func.func @transform_5(%arg0: i32) -> (i32, i32) {
    %c0_i32 = arith.constant 0 : i32
    %c0_i32_0 = arith.constant 0 : i32
    return %arg0, %c0_i32 : i32, i32
  }
}

</mosaic_0001>

<llo_original>
// kernel: tpu_custom_call.1
$region0: #{tpu_custom_call.1}
  #allocation0 [shape = 'u32[]', space=smem, size = 0x4, offset = 0x4, fixed_abs, tag = 'smem constant byte address 0x4 - core index']
  #allocation1 [shape = 'u32[144,128]{1,0:T(1,128)}', space=vmem, size = 0x12000, scoped, tag = 'internal scratch']
  %s0 = inlined_call_operand.hbm [shape: bf16[32,256], index: 0, kind: input, shape index: {}]
  %s1 = inlined_call_operand.hbm [shape: bf16[256,128], index: 1, kind: input, shape index: {}]
  %s2 = inlined_call_operand.vmem [shape: f32[1,128], index: 2, kind: input, shape index: {}]
  %s3 = inlined_call_operand.hbm [shape: bf16[128,128], index: 3, kind: input, shape index: {}]
  %s4 = inlined_call_operand.vmem [shape: f32[1,128], index: 4, kind: input, shape index: {}]
  %s5 = inlined_call_operand.hbm [shape: bf16[32,128], index: 5, kind: output, shape index: {}]
  %s6 = sld [smem:[#allocation0]]
  $region65: #{tpu_custom_call.1} parent=0
    _
  %s8 = ssub.s32 1, %s6
  %s9 = scalar_select 0, %s8, %s6
  $region1: #{tpu_custom_call.1} parent=0
    #allocation2 [shape = 'u8[16384]{0}', space=vmem, size = 0x4000, scoped, tag = 'input window, operand 0']
    #allocation3 [shape = 's32[2]{0}', space=sflag, size = 0x8, scoped, tag = 'scoped memory for tpu_custom_call.1']
    #allocation4 [shape = 's32[2]{0}', space=sflag, size = 0x8, scoped, tag = 'scoped memory for tpu_custom_call.1']
    #allocation5 [shape = 'u8[65536]{0}', space=vmem, size = 0x10000, scoped, tag = 'input window, operand 1, single buffered']
    #allocation6 [shape = 's32[1]{0}', space=sflag, size = 0x4, scoped, tag = 'scoped memory for tpu_custom_call.1']
    #allocation7 [shape = 'u8[32768]{0}', space=vmem, size = 0x8000, scoped, tag = 'input window, operand 3, single buffered']
    #allocation8 [shape = 'u8[8192]{0}', space=vmem, size = 0x2000, scoped, tag = 'output window, operand 0']
    %10 = vsyncpa [#allocation3], 0
    %s11 = scalar_lea.sflag [#allocation3], 1
    %12 = vsyncpa %s11, 0
    %13 = vsyncpa [#allocation6], 0
    %14 = vsyncpa [#allocation4], 0
    %s15 = scalar_lea.sflag [#allocation4], 1
    %16 = vsyncpa %s15, 0
    loop: start=0, step=1, limit=4
    $region2: #{tpu_custom_call.1} parent=1 // loop_pre_header
      _
    $region3: #{tpu_custom_call.1} parent=1 // loop_header
      %s18 = sphi 0, %s22
      %p19 = scmp.ge.s32.totalorder %s18, 4
      %s28 = sphi 0, %s30
      %s31 = sphi 0, %s28
      %s32 = sphi 0, %s31
      %s48 = sphi 0, %s32
      %s52 = sphi 0, %s52
      %s54 = sphi 0, %s52
      %s55 = sphi 0, %s54
      %s69 = sphi 0, %s55
      %s73 = sphi 0, %s73
      %s75 = sphi 0, %s73
      %s76 = sphi 0, %s75
      %s90 = sphi 0, %s76
      %s94 = sphi 0, %s94
      %s96 = sphi 0, %s94
      %s97 = sphi 0, %s96
      %s111 = sphi 0, %s97
      %s115 = sphi 0, %s115
      %s117 = sphi 0, %s115
      %s118 = sphi 0, %s117
      %s132 = sphi 0, %s118
      %s138 = sphi 0, %s140
      %s141 = sphi 0, %s138
      %s142 = sphi 0, %s141
      %s158 = sphi 0, %s142
    $region4: #{tpu_custom_call.1} parent=1 // loop_header_branch
      %21 = sbr.rel (%p19) target = $region8
    $region5: #{tpu_custom_call.1} parent=1 // loop_body
      %s23 = ssub.s32 %s18, 1
      %s24 = ssub.s32 %s18, 2
      %s25 = sadd.s32 %s18, 1
      %s26 = ssub.s32 %s18, %s25
      %p27 = scmp.eq.s32.totalorder %s26, 0
      %s29 = sadd.s32 %s28, 1
      %s30 = scalar_select %p27, %s28, %s29
      %p33 = pneg %p27
      %p34 = scmp.eq.s32.totalorder %s18, 1
      %p35 = por %p33, %p34
      %p36 = scmp.ne.s32.totalorder %s28, %s31
      %p37 = scmp.eq.s32.totalorder %s18, 0
      %p38 = por %p36, %p37
      %p39 = scmp.ne.s32.totalorder %s28, %s31
      %p40 = scmp.eq.s32.totalorder %s23, 1
      %p41 = por %p39, %p40
      %p42 = scmp.ne.s32.totalorder %s31, %s32
      %p43 = scmp.eq.s32.totalorder %s23, 0
      %p44 = por %p42, %p43
      %p45 = scmp.ne.s32.totalorder %s31, %s32
      %p46 = scmp.eq.s32.totalorder %s24, 1
      %p47 = por %p45, %p46
      %p49 = scmp.ne.s32.totalorder %s32, %s48
      %p50 = scmp.eq.s32.totalorder %s24, 0
      %p51 = por %p49, %p50
      %s53 = sadd.s32 %s52, 1
      %p56 = scmp.eq.s32.totalorder %s18, 1
      %p57 = scmp.ne.s32.totalorder %s52, %s54
      %p58 = scmp.eq.s32.totalorder %s18, 0
      %p59 = por %p57, %p58
      %p60 = scmp.ne.s32.totalorder %s52, %s54
      %p61 = scmp.eq.s32.totalorder %s23, 1
      %p62 = por %p60, %p61
      %p63 = scmp.ne.s32.totalorder %s54, %s55
      %p64 = scmp.eq.s32.totalorder %s23, 0
      %p65 = por %p63, %p64
      %p66 = scmp.ne.s32.totalorder %s54, %s55
      %p67 = scmp.eq.s32.totalorder %s24, 1
      %p68 = por %p66, %p67
      %p70 = scmp.ne.s32.totalorder %s55, %s69
      %p71 = scmp.eq.s32.totalorder %s24, 0
      %p72 = por %p70, %p71
      %s74 = sadd.s32 %s73, 1
      %p77 = scmp.eq.s32.totalorder %s18, 1
      %p78 = scmp.ne.s32.totalorder %s73, %s75
      %p79 = scmp.eq.s32.totalorder %s18, 0
      %p80 = por %p78, %p79
      %p81 = scmp.ne.s32.totalorder %s73, %s75
      %p82 = scmp.eq.s32.totalorder %s23, 1
      %p83 = por %p81, %p82
      %p84 = scmp.ne.s32.totalorder %s75, %s76
      %p85 = scmp.eq.s32.totalorder %s23, 0
      %p86 = por %p84, %p85
      %p87 = scmp.ne.s32.totalorder %s75, %s76
      %p88 = scmp.eq.s32.totalorder %s24, 1
      %p89 = por %p87, %p88
      %p91 = scmp.ne.s32.totalorder %s76, %s90
      %p92 = scmp.eq.s32.totalorder %s24, 0
      %p93 = por %p91, %p92
      %s95 = sadd.s32 %s94, 1
      %p98 = scmp.eq.s32.totalorder %s18, 1
      %p99 = scmp.ne.s32.totalorder %s94, %s96
      %p100 = scmp.eq.s32.totalorder %s18, 0
      %p101 = por %p99, %p100
      %p102 = scmp.ne.s32.totalorder %s94, %s96
      %p103 = scmp.eq.s32.totalorder %s23, 1
      %p104 = por %p102, %p103
      %p105 = scmp.ne.s32.totalorder %s96, %s97
      %p106 = scmp.eq.s32.totalorder %s23, 0
      %p107 = por %p105, %p106
      %p108 = scmp.ne.s32.totalorder %s96, %s97
      %p109 = scmp.eq.s32.totalorder %s24, 1
      %p110 = por %p108, %p109
      %p112 = scmp.ne.s32.totalorder %s97, %s111
      %p113 = scmp.eq.s32.totalorder %s24, 0
      %p114 = por %p112, %p113
      %s116 = sadd.s32 %s115, 1
      %p119 = scmp.eq.s32.totalorder %s18, 1
      %p120 = scmp.ne.s32.totalorder %s115, %s117
      %p121 = scmp.eq.s32.totalorder %s18, 0
      %p122 = por %p120, %p121
      %p123 = scmp.ne.s32.totalorder %s115, %s117
      %p124 = scmp.eq.s32.totalorder %s23, 1
      %p125 = por %p123, %p124
      %p126 = scmp.ne.s32.totalorder %s117, %s118
      %p127 = scmp.eq.s32.totalorder %s23, 0
      %p128 = por %p126, %p127
      %p129 = scmp.ne.s32.totalorder %s117, %s118
      %p130 = scmp.eq.s32.totalorder %s24, 1
      %p131 = por %p129, %p130
      %p133 = scmp.ne.s32.totalorder %s118, %s132
      %p134 = scmp.eq.s32.totalorder %s24, 0
      %p135 = por %p133, %p134
      %s136 = ssub.s32 %s18, %s25
      %p137 = scmp.eq.s32.totalorder %s136, 0
      %s139 = sadd.s32 %s138, 1
      %s140 = scalar_select %p137, %s138, %s139
      %p143 = pneg %p137
      %p144 = scmp.eq.s32.totalorder %s18, 1
      %p145 = por %p143, %p144
      %p146 = scmp.ne.s32.totalorder %s138, %s141
      %p147 = scmp.eq.s32.totalorder %s18, 0
      %p148 = por %p146, %p147
      %p149 = scmp.ne.s32.totalorder %s138, %s141
      %p150 = scmp.eq.s32.totalorder %s23, 1
      %p151 = por %p149, %p150
      %p152 = scmp.ne.s32.totalorder %s141, %s142
      %p153 = scmp.eq.s32.totalorder %s23, 0
      %p154 = por %p152, %p153
      %p155 = scmp.ne.s32.totalorder %s141, %s142
      %p156 = scmp.eq.s32.totalorder %s24, 1
      %p157 = por %p155, %p156
      %p159 = scmp.ne.s32.totalorder %s142, %s158
      %p160 = scmp.eq.s32.totalorder %s24, 0
      %p161 = por %p159, %p160
      %p162 = scmp.le.s32.totalorder 1, %s18
      %p163 = scmp.lt.s32.totalorder %s18, 3
      %p164 = pnand %p162, %p163
      %p165 = pneg %p164
      // Predicated region
      $region9: #{tpu_custom_call.1} parent=5 // pred_check
        _
      $region10: #{tpu_custom_call.1} parent=5 // pred_check_branch
        %167 = sbr.rel (%p164) target = $region12
      $region11: #{tpu_custom_call.1} parent=5 // pred_region
        %s168 = ssub.s32 %s18, 1
        // Predicated region
        $region13: #{tpu_custom_call.1} parent=11 // pred_check
          %p169 = pneg %p65
        $region14: #{tpu_custom_call.1} parent=11 // pred_check_branch
          %171 = sbr.rel (%p169) target = $region16
        $region15: #{tpu_custom_call.1} parent=11 // pred_region
          %s173 = ssub.s32 2048, 2048
          %174 = vsyncadd [#allocation6], %s173
          %s175 = sshll.u32 [#allocation5], 4
          %s176 = int_to_ptr.vmem [resolvable:$true] %s175
          %181 = dma.hbm_to_vmem [thread:$0]  %s1, 2048, %s176, [#allocation6], 64, 64, 4
        $region16: #{tpu_custom_call.1} parent=11 // pred_fallthru
          _
        // Predicated region
        $region17: #{tpu_custom_call.1} parent=11 // pred_check
          %p182 = pneg %p86
        $region18: #{tpu_custom_call.1} parent=11 // pred_check_branch
          %184 = sbr.rel (%p182) target = $region20
        $region19: #{tpu_custom_call.1} parent=11 // pred_region
          _
        $region20: #{tpu_custom_call.1} parent=11 // pred_fallthru
          _
        // Predicated region
        $region21: #{tpu_custom_call.1} parent=11 // pred_check
          %p185 = pneg %p107
        $region22: #{tpu_custom_call.1} parent=11 // pred_check_branch
          %187 = sbr.rel (%p185) target = $region24
        $region23: #{tpu_custom_call.1} parent=11 // pred_region
          %s189 = ssub.s32 1024, 1024
          %190 = vsyncadd [#allocation6], %s189
          %s191 = sshll.u32 [#allocation7], 4
          %s192 = int_to_ptr.vmem [resolvable:$true] %s191
          %197 = dma.hbm_to_vmem [thread:$0]  %s3, 1024, %s192, [#allocation6], 64, 64, 4
        $region24: #{tpu_custom_call.1} parent=11 // pred_fallthru
          _
        // Predicated region
        $region25: #{tpu_custom_call.1} parent=11 // pred_check
          %p198 = pneg %p128
        $region26: #{tpu_custom_call.1} parent=11 // pred_check_branch
          %200 = sbr.rel (%p198) target = $region28
        $region27: #{tpu_custom_call.1} parent=11 // pred_region
          _
        $region28: #{tpu_custom_call.1} parent=11 // pred_fallthru
          _
      $region12: #{tpu_custom_call.1} parent=5 // pred_fallthru
        _
      %p201 = scmp.lt.s32.totalorder %s18, 2
      // Predicated region
      $region29: #{tpu_custom_call.1} parent=5 // pred_check
        %p202 = pneg %p201
      $region30: #{tpu_custom_call.1} parent=5 // pred_check_branch
        %204 = sbr.rel (%p202) target = $region32
      $region31: #{tpu_custom_call.1} parent=5 // pred_region
        // Predicated region
        $region33: #{tpu_custom_call.1} parent=31 // pred_check
          %p205 = pneg %p38
        $region34: #{tpu_custom_call.1} parent=31 // pred_check_branch
          %207 = sbr.rel (%p205) target = $region36
        $region35: #{tpu_custom_call.1} parent=31 // pred_region
          %s208 = sand.u32 %s28, 1
          %s209 = scalar_lea.sflag [#allocation3], %s208
          %s210 = sand.u32 %s28, 1
          %s211 = smul.addr %s210, 16
          %s212 = scalar_lea.vmem [#allocation2], %s211
          %s213 = smul.u32 2, %s18
          %s215 = ssub.s32 256, 256
          %216 = vsyncadd %s209, %s215
          %s217 = smul.addr %s213, 2
          %s218 = smul.addr %s217, 64
          %s219 = scalar_lea.hbm %s0, %s218
          %s220 = sshll.u32 %s212, 4
          %s221 = int_to_ptr.vmem [resolvable:$true] %s220
          %226 = dma.hbm_to_vmem [thread:$0]  %s219, 256, %s221, %s209, 128, 128, 8
        $region36: #{tpu_custom_call.1} parent=31 // pred_fallthru
          _
      $region32: #{tpu_custom_call.1} parent=5 // pred_fallthru
        _
      %p227 = scmp.le.s32.totalorder 1, %s18
      %p228 = scmp.lt.s32.totalorder %s18, 3
      %p229 = pnand %p227, %p228
      %p230 = pneg %p229
      // Predicated region
      $region37: #{tpu_custom_call.1} parent=5 // pred_check
        _
      $region38: #{tpu_custom_call.1} parent=5 // pred_check_branch
        %232 = sbr.rel (%p229) target = $region40
      $region39: #{tpu_custom_call.1} parent=5 // pred_region
        %s233 = ssub.s32 %s18, 1
        %s234 = sand.u32 %s31, 1
        %s235 = scalar_lea.sflag [#allocation3], %s234
        %s236 = sand.u32 %s31, 1
        %s237 = smul.addr %s236, 16
        %s238 = scalar_lea.vmem [#allocation2], %s237
        // Predicated region
        $region41: #{tpu_custom_call.1} parent=39 // pred_check
          %p239 = pneg %p44
        $region42: #{tpu_custom_call.1} parent=39 // pred_check_branch
          %241 = sbr.rel (%p239) target = $region44
        $region43: #{tpu_custom_call.1} parent=39 // pred_region
          %242 = dma.done %s235, 256
        $region44: #{tpu_custom_call.1} parent=39 // pred_fallthru
          _
        // Predicated region
        $region45: #{tpu_custom_call.1} parent=39 // pred_check
          %p243 = pneg %p65
        $region46: #{tpu_custom_call.1} parent=39 // pred_check_branch
          %245 = sbr.rel (%p243) target = $region48
        $region47: #{tpu_custom_call.1} parent=39 // pred_region
          %246 = dma.done [#allocation6], 2048
        $region48: #{tpu_custom_call.1} parent=39 // pred_fallthru
          _
        // Predicated region
        $region49: #{tpu_custom_call.1} parent=39 // pred_check
          %p247 = pneg %p107
        $region50: #{tpu_custom_call.1} parent=39 // pred_check_branch
          %249 = sbr.rel (%p247) target = $region52
        $region51: #{tpu_custom_call.1} parent=39 // pred_region
          %250 = dma.done [#allocation6], 1024
        $region52: #{tpu_custom_call.1} parent=39 // pred_fallthru
          _
        %s251 = sand.u32 %s31, 1
        %s252 = scalar_lea.sflag [#allocation3], %s251
        %s253 = sand.u32 %s31, 1
        %s254 = smul.addr %s253, 16
        %s255 = scalar_lea.vmem [#allocation2], %s254
        %p256 = pneg %p44
        %p257 = pneg %p41
        %p258 = pneg %p65
        %p259 = pneg %p62
        %p260 = pneg %p86
        %p261 = pneg %p83
        %p262 = pneg %p107
        %p263 = pneg %p104
        %p264 = pneg %p128
        %p265 = pneg %p125
        %p266 = pneg %p154
        %p267 = pneg %p151
        %s268 = sand.u32 %s141, 1
        %s269 = scalar_lea.sflag [#allocation4], %s268
        %s270 = sand.u32 %s141, 1
        %s271 = smul.addr %s270, 8
        %s272 = scalar_lea.vmem [#allocation8], %s271
        %s273 = smul.u32 2, %s23
        %s274 = smul.u32 2, %s23
        %v276 = vld [vmem:[%s238] sm:$0xff]
        %v277 = vld [vmem:[%s238 + $0x8] sm:$0xff]
        %v278 = vld [vmem:[#allocation5] sm:$0xf]
        %v279 = vld [vmem:[#allocation5 + $0x4] sm:$0xf]
        %v280 = vld [vmem:[#allocation5 + $0x8] sm:$0xf]
        %v281 = vld [vmem:[#allocation5 + $0xc] sm:$0xf]
        %v282 = vld [vmem:[#allocation5 + $0x10] sm:$0xf]
        %v283 = vld [vmem:[#allocation5 + $0x14] sm:$0xf]
        %v284 = vld [vmem:[#allocation5 + $0x18] sm:$0xf]
        %v285 = vld [vmem:[#allocation5 + $0x1c] sm:$0xf]
        %v286 = vld [vmem:[#allocation5 + $0x20] sm:$0xf]
        %v287 = vld [vmem:[#allocation5 + $0x24] sm:$0xf]
        %v288 = vld [vmem:[#allocation5 + $0x28] sm:$0xf]
        %v289 = vld [vmem:[#allocation5 + $0x2c] sm:$0xf]
        %v290 = vld [vmem:[#allocation5 + $0x30] sm:$0xf]
        %v291 = vld [vmem:[#allocation5 + $0x34] sm:$0xf]
        %v292 = vld [vmem:[#allocation5 + $0x38] sm:$0xf]
        %v293 = vld [vmem:[#allocation5 + $0x3c] sm:$0xf]
        %v294 = vld [vmem:[#allocation5 + $0x40] sm:$0xf]
        %v295 = vld [vmem:[#allocation5 + $0x44] sm:$0xf]
        %v296 = vld [vmem:[#allocation5 + $0x48] sm:$0xf]
        %v297 = vld [vmem:[#allocation5 + $0x4c] sm:$0xf]
        %v298 = vld [vmem:[#allocation5 + $0x50] sm:$0xf]
        %v299 = vld [vmem:[#allocation5 + $0x54] sm:$0xf]
        %v300 = vld [vmem:[#allocation5 + $0x58] sm:$0xf]
        %v301 = vld [vmem:[#allocation5 + $0x5c] sm:$0xf]
        %v302 = vld [vmem:[#allocation5 + $0x60] sm:$0xf]
        %v303 = vld [vmem:[#allocation5 + $0x64] sm:$0xf]
        %v304 = vld [vmem:[#allocation5 + $0x68] sm:$0xf]
        %v305 = vld [vmem:[#allocation5 + $0x6c] sm:$0xf]
        %v306 = vld [vmem:[#allocation5 + $0x70] sm:$0xf]
        %v307 = vld [vmem:[#allocation5 + $0x74] sm:$0xf]
        %v308 = vld [vmem:[#allocation5 + $0x78] sm:$0xf]
        %v309 = vld [vmem:[#allocation5 + $0x7c] sm:$0xf]
        %v310 = vld [vmem:[%s2] sm:$0x1]
        %v312 = vlaneseq
        %v313 = vshrl.u32 %v312, 7
        %v314 = vsub.s32 0, %v313
        %v315 = vrot.slane %v310, %v314
        %v319 = vunpack.c.l.b16 %v276
        %v320 = vunpack.c.h.b16 %v276
        %v321 = vunpack.c.l.b16 %v277
        %v322 = vunpack.c.h.b16 %v277
        %v323 = vpack.c.b16 %v321, %v319
        %v324 = vpack.c.b16 %v322, %v320
        %v359 = vunpack.c.l.b16 %v278
        %v360 = vunpack.c.l.b16 %v279
        %v361 = vunpack.c.l.b16 %v280
        %v362 = vunpack.c.l.b16 %v281
        %v363 = vunpack.c.l.b16 %v282
        %v364 = vunpack.c.l.b16 %v283
        %v365 = vunpack.c.l.b16 %v284
        %v366 = vunpack.c.l.b16 %v285
        %v367 = vunpack.c.l.b16 %v286
        %v368 = vunpack.c.l.b16 %v287
        %v369 = vunpack.c.l.b16 %v288
        %v370 = vunpack.c.l.b16 %v289
        %v371 = vunpack.c.l.b16 %v290
        %v372 = vunpack.c.l.b16 %v291
        %v373 = vunpack.c.l.b16 %v292
        %v374 = vunpack.c.l.b16 %v293
        %v375 = vunpack.c.l.b16 %v294
        %v376 = vunpack.c.l.b16 %v295
        %v377 = vunpack.c.l.b16 %v296
        %v378 = vunpack.c.l.b16 %v297
        %v379 = vunpack.c.l.b16 %v298
        %v380 = vunpack.c.l.b16 %v299
        %v381 = vunpack.c.l.b16 %v300
        %v382 = vunpack.c.l.b16 %v301
        %v383 = vunpack.c.l.b16 %v302
        %v384 = vunpack.c.l.b16 %v303
        %v385 = vunpack.c.l.b16 %v304
        %v386 = vunpack.c.l.b16 %v305
        %v387 = vunpack.c.l.b16 %v306
        %v388 = vunpack.c.l.b16 %v307
        %v389 = vunpack.c.l.b16 %v308
        %v390 = vunpack.c.l.b16 %v309
        %v391 = vpack.c.b16 %v360, %v359
        %v392 = vpack.c.b16 %v362, %v361
        %v393 = vpack.c.b16 %v364, %v363
        %v394 = vpack.c.b16 %v366, %v365
        %v395 = vpack.c.b16 %v368, %v367
        %v396 = vpack.c.b16 %v370, %v369
        %v397 = vpack.c.b16 %v372, %v371
        %v398 = vpack.c.b16 %v374, %v373
        %v399 = vpack.c.b16 %v376, %v375
        %v400 = vpack.c.b16 %v378, %v377
        %v401 = vpack.c.b16 %v380, %v379
        %v402 = vpack.c.b16 %v382, %v381
        %v403 = vpack.c.b16 %v384, %v383
        %v404 = vpack.c.b16 %v386, %v385
        %v405 = vpack.c.b16 %v388, %v387
        %v406 = vpack.c.b16 %v390, %v389
        %423 = vmatprep.subr.bf16.mxu0 0
        %424 = vmatpush1.bf16.msra.mxu0 %v391
        %425 = vmatprep.subr.bf16.mxu0 0
        %426 = vmatpush1.bf16.msra.mxu0 %v392
        %427 = vmatprep.subr.bf16.mxu0 0
        %428 = vmatpush1.bf16.msra.mxu0 %v393
        %429 = vmatprep.subr.bf16.mxu0 0
        %430 = vmatpush1.bf16.msra.mxu0 %v394
        %431 = vmatprep.subr.bf16.mxu0 0
        %432 = vmatpush1.bf16.msra.mxu0 %v395
        %433 = vmatprep.subr.bf16.mxu0 0
        %434 = vmatpush1.bf16.msra.mxu0 %v396
        %435 = vmatprep.subr.bf16.mxu0 0
        %436 = vmatpush1.bf16.msra.mxu0 %v397
        %437 = vmatprep.subr.bf16.mxu0 0
        %438 = vmatpush1.bf16.msra.mxu0 %v398
        %439 = vmatprep.subr.bf16.mxu0 0
        %440 = vmatpush1.bf16.msra.mxu0 %v399
        %441 = vmatprep.subr.bf16.mxu0 0
        %442 = vmatpush1.bf16.msra.mxu0 %v400
        %443 = vmatprep.subr.bf16.mxu0 0
        %444 = vmatpush1.bf16.msra.mxu0 %v401
        %445 = vmatprep.subr.bf16.mxu0 0
        %446 = vmatpush1.bf16.msra.mxu0 %v402
        %447 = vmatprep.subr.bf16.mxu0 0
        %448 = vmatpush1.bf16.msra.mxu0 %v403
        %449 = vmatprep.subr.bf16.mxu0 0
        %450 = vmatpush1.bf16.msra.mxu0 %v404
        %451 = vmatprep.subr.bf16.mxu0 0
        %452 = vmatpush1.bf16.msra.mxu0 %v405
        %453 = vmatprep.subr.bf16.mxu0 0
        %454 = vmatpush1.bf16.msra.mxu0 %v406
        %455 = vmatprep.mubr.bf16.mxu0 %v324
        %456 = vmatmul.mubr.bf16.gmra.mrb[0].mxu0 %v323
        %v457 = vpop.f32.mrb[0].mxu0
        %v458 = vadd.f32 %v315, %v457
        %v459 = vpop.f32.mrb[0].mxu0
        %v460 = vpop.f32.mrb[0].mxu0
        %v461 = vadd.f32 %v315, %v460
        %v462 = vpop.f32.mrb[0].mxu0
        %463 = vdwg.mxu0
        %v464 = vmax.f32 %v458, 0.0
        %v465 = vmax.f32 %v461, 0.0
        %v466 = vpack.c.bf16 %v465, %v464
        %v467 = vld [vmem:[#allocation7] sm:$0xf]
        %v468 = vld [vmem:[#allocation7 + $0x4] sm:$0xf]
        %v469 = vld [vmem:[#allocation7 + $0x8] sm:$0xf]
        %v470 = vld [vmem:[#allocation7 + $0xc] sm:$0xf]
        %v471 = vld [vmem:[#allocation7 + $0x10] sm:$0xf]
        %v472 = vld [vmem:[#allocation7 + $0x14] sm:$0xf]
        %v473 = vld [vmem:[#allocation7 + $0x18] sm:$0xf]
        %v474 = vld [vmem:[#allocation7 + $0x1c] sm:$0xf]
        %v475 = vld [vmem:[#allocation7 + $0x20] sm:$0xf]
        %v476 = vld [vmem:[#allocation7 + $0x24] sm:$0xf]
        %v477 = vld [vmem:[#allocation7 + $0x28] sm:$0xf]
        %v478 = vld [vmem:[#allocation7 + $0x2c] sm:$0xf]
        %v479 = vld [vmem:[#allocation7 + $0x30] sm:$0xf]
        %v480 = vld [vmem:[#allocation7 + $0x34] sm:$0xf]
        %v481 = vld [vmem:[#allocation7 + $0x38] sm:$0xf]
        %v482 = vld [vmem:[#allocation7 + $0x3c] sm:$0xf]
        %v483 = vld [vmem:[%s4] sm:$0x1]
        %v485 = vlaneseq
        %v486 = vshrl.u32 %v485, 7
        %v487 = vsub.s32 0, %v486
        %v488 = vrot.slane %v483, %v487
        %v506 = vunpack.c.l.b16 %v467
        %v507 = vunpack.c.l.b16 %v468
        %v508 = vunpack.c.l.b16 %v469
        %v509 = vunpack.c.l.b16 %v470
        %v510 = vunpack.c.l.b16 %v471
        %v511 = vunpack.c.l.b16 %v472
        %v512 = vunpack.c.l.b16 %v473
        %v513 = vunpack.c.l.b16 %v474
        %v514 = vunpack.c.l.b16 %v475
        %v515 = vunpack.c.l.b16 %v476
        %v516 = vunpack.c.l.b16 %v477
        %v517 = vunpack.c.l.b16 %v478
        %v518 = vunpack.c.l.b16 %v479
        %v519 = vunpack.c.l.b16 %v480
        %v520 = vunpack.c.l.b16 %v481
        %v521 = vunpack.c.l.b16 %v482
        %v522 = vpack.c.b16 %v507, %v506
        %v523 = vpack.c.b16 %v509, %v508
        %v524 = vpack.c.b16 %v511, %v510
        %v525 = vpack.c.b16 %v513, %v512
        %v526 = vpack.c.b16 %v515, %v514
        %v527 = vpack.c.b16 %v517, %v516
        %v528 = vpack.c.b16 %v519, %v518
        %v529 = vpack.c.b16 %v521, %v520
        %538 = vmatprep.subr.bf16.mxu0 0
        %539 = vmatpush1.bf16.msra.mxu0 %v522
        %540 = vmatprep.subr.bf16.mxu0 0
        %541 = vmatpush1.bf16.msra.mxu0 %v523
        %542 = vmatprep.subr.bf16.mxu0 0
        %543 = vmatpush1.bf16.msra.mxu0 %v524
        %544 = vmatprep.subr.bf16.mxu0 0
        %545 = vmatpush1.bf16.msra.mxu0 %v525
        %546 = vmatprep.subr.bf16.mxu0 0
        %547 = vmatpush1.bf16.msra.mxu0 %v526
        %548 = vmatprep.subr.bf16.mxu0 0
        %549 = vmatpush1.bf16.msra.mxu0 %v527
        %550 = vmatprep.subr.bf16.mxu0 0
        %551 = vmatpush1.bf16.msra.mxu0 %v528
        %552 = vmatprep.subr.bf16.mxu0 0
        %553 = vmatpush1.bf16.msra.mxu0 %v529
        %554 = vmatprep.subr.bf16.mxu0 0
        %555 = vmatpush1.bf16.msra.mxu0 0
        %556 = vmatprep.subr.bf16.mxu0 0
        %557 = vmatpush1.bf16.msra.mxu0 0
        %558 = vmatprep.subr.bf16.mxu0 0
        %559 = vmatpush1.bf16.msra.mxu0 0
        %560 = vmatprep.subr.bf16.mxu0 0
        %561 = vmatpush1.bf16.msra.mxu0 0
        %562 = vmatprep.subr.bf16.mxu0 0
        %563 = vmatpush1.bf16.msra.mxu0 0
        %564 = vmatprep.subr.bf16.mxu0 0
        %565 = vmatpush1.bf16.msra.mxu0 0
        %566 = vmatprep.subr.bf16.mxu0 0
        %567 = vmatpush1.bf16.msra.mxu0 0
        %568 = vmatprep.subr.bf16.mxu0 0
        %569 = vmatpush1.bf16.msra.mxu0 0
        %570 = vmatprep.mubr.bf16.mxu0 0
        %571 = vmatmul.mubr.bf16.gmra.mrb[0].mxu0 %v466
        %v572 = vpop.f32.mrb[0].mxu0
        %v573 = vadd.f32 %v488, %v572
        %v574 = vpop.f32.mrb[0].mxu0
        %v575 = vpop.f32.mrb[0].mxu0
        %v576 = vadd.f32 %v488, %v575
        %v577 = vpop.f32.mrb[0].mxu0
        %578 = vdwg.mxu0
        %v579 = vpack.c.bf16 %v576, %v573
        %v581 = vunpack.c.l.b16 %v579
        %v582 = vunpack.c.h.b16 %v579
        %v583 = vpack.c.b16 %v581, %v581
        %v584 = vpack.c.b16 %v582, %v582
        %587 = vst [vmem:[%s272] sm:$0xf] %v583
        %588 = vst [vmem:[%s272 + $0x4] sm:$0xf] %v584
        %s589 = sand.u32 %s141, 1
        %s590 = scalar_lea.sflag [#allocation4], %s589
        %s591 = sand.u32 %s141, 1
        %s592 = smul.addr %s591, 8
        %s593 = scalar_lea.vmem [#allocation8], %s592
        // Predicated region
        $region53: #{tpu_custom_call.1} parent=39 // pred_check
          %p594 = pneg %p151
        $region54: #{tpu_custom_call.1} parent=39 // pred_check_branch
          %596 = sbr.rel (%p594) target = $region56
        $region55: #{tpu_custom_call.1} parent=39 // pred_region
          %s597 = smul.u32 2, %s23
          %s599 = ssub.s32 128, 128
          %600 = vsyncadd %s590, %s599
          %s601 = smul.addr %s597, 64
          %s602 = scalar_lea.hbm %s5, %s601
          %s603 = sshll.u32 %s593, 4
          %s604 = int_to_ptr.vmem [resolvable:$true] %s603
          %609 = dma.vmem_to_hbm [thread:$0]  %s604, 128, %s602, %s590, 64, 64, 4
        $region56: #{tpu_custom_call.1} parent=39 // pred_fallthru
          _
      $region40: #{tpu_custom_call.1} parent=5 // pred_fallthru
        _
      %p610 = scmp.le.s32.totalorder 2, %s18
      // Predicated region
      $region57: #{tpu_custom_call.1} parent=5 // pred_check
        %p611 = pneg %p610
      $region58: #{tpu_custom_call.1} parent=5 // pred_check_branch
        %613 = sbr.rel (%p611) target = $region60
      $region59: #{tpu_custom_call.1} parent=5 // pred_region
        %s614 = ssub.s32 %s18, 2
        // Predicated region
        $region61: #{tpu_custom_call.1} parent=59 // pred_check
          %p615 = pneg %p157
        $region62: #{tpu_custom_call.1} parent=59 // pred_check_branch
          %617 = sbr.rel (%p615) target = $region64
        $region63: #{tpu_custom_call.1} parent=59 // pred_region
          %s618 = sand.u32 %s142, 1
          %s619 = scalar_lea.sflag [#allocation4], %s618
          %s620 = sand.u32 %s142, 1
          %s621 = smul.addr %s620, 8
          %s622 = scalar_lea.vmem [#allocation8], %s621
          %623 = dma.done %s619, 128
        $region64: #{tpu_custom_call.1} parent=59 // pred_fallthru
          _
      $region60: #{tpu_custom_call.1} parent=5 // pred_fallthru
        _
    $region6: #{tpu_custom_call.1} parent=1 // loop_footer
      %s22 = sadd.s32 1, %s18
    $region7: #{tpu_custom_call.1} parent=1 // loop_footer_branch
      %17 = sbr.rel target = $region3
    $region8: #{tpu_custom_call.1} parent=1 // loop_exit
      _
    %624 = vsyncpa [#allocation3], 1
    %s625 = scalar_lea.sflag [#allocation3], 1
    %626 = vsyncpa %s625, 1
    %627 = vsyncpa [#allocation6], 1
    %628 = vsyncpa [#allocation4], 1
    %s629 = scalar_lea.sflag [#allocation4], 1
    %630 = vsyncpa %s629, 1

// kernel: tpu_custom_call.1
$region0: #{tpu_custom_call.1}
  #allocation0 [shape = 'u32[]', space=smem, size = 0x4, offset = 0x4, fixed_abs, tag = 'smem constant byte address 0x4 - core index']
  #allocation1 [shape = 'u32[144,128]{1,0:T(1,128)}', space=vmem, size = 0x12000, scoped, tag = 'internal scratch']
  %s0 = inlined_call_operand.hbm [shape: bf16[32,256], index: 0, kind: input, shape index: {}]
  %s1 = inlined_call_operand.hbm [shape: bf16[256,128], index: 1, kind: input, shape index: {}]
  %s2 = inlined_call_operand.vmem [shape: f32[1,128], index: 2, kind: input, shape index: {}]
  %s3 = inlined_call_operand.hbm [shape: bf16[128,128], index: 3, kind: input, shape index: {}]
  %s4 = inlined_call_operand.vmem [shape: f32[1,128], index: 4, kind: input, shape index: {}]
  %s5 = inlined_call_operand.hbm [shape: bf16[32,128], index: 5, kind: output, shape index: {}]
  %s6 = sld [smem:[#allocation0]]
  $region65: #{tpu_custom_call.1} parent=0
    _
  %s8 = ssub.s32 1, %s6
  %s9 = scalar_select 0, %s8, %s6
  $region1: #{tpu_custom_call.1} parent=0
    #allocation2 [shape = 'u8[16384]{0}', space=vmem, size = 0x4000, scoped, tag = 'input window, operand 0']
    #allocation3 [shape = 's32[2]{0}', space=sflag, size = 0x8, scoped, tag = 'scoped memory for tpu_custom_call.1']
    #allocation4 [shape = 's32[2]{0}', space=sflag, size = 0x8, scoped, tag = 'scoped memory for tpu_custom_call.1']
    #allocation5 [shape = 'u8[65536]{0}', space=vmem, size = 0x10000, scoped, tag = 'input window, operand 1, single buffered']
    #allocation6 [shape = 's32[1]{0}', space=sflag, size = 0x4, scoped, tag = 'scoped memory for tpu_custom_call.1']
    #allocation7 [shape = 'u8[32768]{0}', space=vmem, size = 0x8000, scoped, tag = 'input window, operand 3, single buffered']
    #allocation8 [shape = 'u8[8192]{0}', space=vmem, size = 0x2000, scoped, tag = 'output window, operand 0']
    %10 = vsyncpa [#allocation3], 0
    %s11 = scalar_lea.sflag [#allocation3], 1
    %12 = vsyncpa %s11, 0
    %13 = vsyncpa [#allocation6], 0
    %14 = vsyncpa [#allocation4], 0
    %s15 = scalar_lea.sflag [#allocation4], 1
    %16 = vsyncpa %s15, 0
    loop: start=0, step=1, limit=4
    $region2: #{tpu_custom_call.1} parent=1 // loop_pre_header
      _
    $region3: #{tpu_custom_call.1} parent=1 // loop_header
      %s18 = sphi 0, %s22
      %p19 = scmp.ge.s32.totalorder %s18, 4
      %s28 = sphi 0, %s30
      %s31 = sphi 0, %s28
      %s32 = sphi 0, %s31
      %s48 = sphi 0, %s32
      %s52 = sphi 0, %s52
      %s54 = sphi 0, %s52
      %s55 = sphi 0, %s54
      %s69 = sphi 0, %s55
      %s73 = sphi 0, %s73
      %s75 = sphi 0, %s73
      %s76 = sphi 0, %s75
      %s90 = sphi 0, %s76
      %s94 = sphi 0, %s94
      %s96 = sphi 0, %s94
      %s97 = sphi 0, %s96
      %s111 = sphi 0, %s97
      %s115 = sphi 0, %s115
      %s117 = sphi 0, %s115
      %s118 = sphi 0, %s117
      %s132 = sphi 0, %s118
      %s138 = sphi 0, %s140
      %s141 = sphi 0, %s138
      %s142 = sphi 0, %s141
      %s158 = sphi 0, %s142
    $region4: #{tpu_custom_call.1} parent=1 // loop_header_branch
      %21 = sbr.rel (%p19) target = $region8
    $region5: #{tpu_custom_call.1} parent=1 // loop_body
      %s23 = ssub.s32 %s18, 1
      %s24 = ssub.s32 %s18, 2
      %s25 = sadd.s32 %s18, 1
      %s26 = ssub.s32 %s18, %s25
      %p27 = scmp.eq.s32.totalorder %s26, 0
      %s29 = sadd.s32 %s28, 1
      %s30 = scalar_select %p27, %s28, %s29
      %p33 = pneg %p27
      %p34 = scmp.eq.s32.totalorder %s18, 1
      %p35 = por %p33, %p34
      %p36 = scmp.ne.s32.totalorder %s28, %s31
      %p37 = scmp.eq.s32.totalorder %s18, 0
      %p38 = por %p36, %p37
      %p39 = scmp.ne.s32.totalorder %s28, %s31
      %p40 = scmp.eq.s32.totalorder %s23, 1
      %p41 = por %p39, %p40
      %p42 = scmp.ne.s32.totalorder %s31, %s32
      %p43 = scmp.eq.s32.totalorder %s23, 0
      %p44 = por %p42, %p43
      %p45 = scmp.ne.s32.totalorder %s31, %s32
      %p46 = scmp.eq.s32.totalorder %s24, 1
      %p47 = por %p45, %p46
      %p49 = scmp.ne.s32.totalorder %s32, %s48
      %p50 = scmp.eq.s32.totalorder %s24, 0
      %p51 = por %p49, %p50
      %s53 = sadd.s32 %s52, 1
      %p56 = scmp.eq.s32.totalorder %s18, 1
      %p57 = scmp.ne.s32.totalorder %s52, %s54
      %p58 = scmp.eq.s32.totalorder %s18, 0
      %p59 = por %p57, %p58
      %p60 = scmp.ne.s32.totalorder %s52, %s54
      %p61 = scmp.eq.s32.totalorder %s23, 1
      %p62 = por %p60, %p61
      %p63 = scmp.ne.s32.totalorder %s54, %s55
      %p64 = scmp.eq.s32.totalorder %s23, 0
      %p65 = por %p63, %p64
      %p66 = scmp.ne.s32.totalorder %s54, %s55
      %p67 = scmp.eq.s32.totalorder %s24, 1
      %p68 = por %p66, %p67
      %p70 = scmp.ne.s32.totalorder %s55, %s69
      %p71 = scmp.eq.s32.totalorder %s24, 0
      %p72 = por %p70, %p71
      %s74 = sadd.s32 %s73, 1
      %p77 = scmp.eq.s32.totalorder %s18, 1
      %p78 = scmp.ne.s32.totalorder %s73, %s75
      %p79 = scmp.eq.s32.totalorder %s18, 0
      %p80 = por %p78, %p79
      %p81 = scmp.ne.s32.totalorder %s73, %s75
      %p82 = scmp.eq.s32.totalorder %s23, 1
      %p83 = por %p81, %p82
      %p84 = scmp.ne.s32.totalorder %s75, %s76
      %p85 = scmp.eq.s32.totalorder %s23, 0
      %p86 = por %p84, %p85
      %p87 = scmp.ne.s32.totalorder %s75, %s76
      %p88 = scmp.eq.s32.totalorder %s24, 1
      %p89 = por %p87, %p88
      %p91 = scmp.ne.s32.totalorder %s76, %s90
      %p92 = scmp.eq.s32.totalorder %s24, 0
      %p93 = por %p91, %p92
      %s95 = sadd.s32 %s94, 1
      %p98 = scmp.eq.s32.totalorder %s18, 1
      %p99 = scmp.ne.s32.totalorder %s94, %s96
      %p100 = scmp.eq.s32.totalorder %s18, 0
      %p101 = por %p99, %p100
      %p102 = scmp.ne.s32.totalorder %s94, %s96
      %p103 = scmp.eq.s32.totalorder %s23, 1
      %p104 = por %p102, %p103
      %p105 = scmp.ne.s32.totalorder %s96, %s97
      %p106 = scmp.eq.s32.totalorder %s23, 0
      %p107 = por %p105, %p106
      %p108 = scmp.ne.s32.totalorder %s96, %s97
      %p109 = scmp.eq.s32.totalorder %s24, 1
      %p110 = por %p108, %p109
      %p112 = scmp.ne.s32.totalorder %s97, %s111
      %p113 = scmp.eq.s32.totalorder %s24, 0
      %p114 = por %p112, %p113
      %s116 = sadd.s32 %s115, 1
      %p119 = scmp.eq.s32.totalorder %s18, 1
      %p120 = scmp.ne.s32.totalorder %s115, %s117
      %p121 = scmp.eq.s32.totalorder %s18, 0
      %p122 = por %p120, %p121
      %p123 = scmp.ne.s32.totalorder %s115, %s117
      %p124 = scmp.eq.s32.totalorder %s23, 1
      %p125 = por %p123, %p124
      %p126 = scmp.ne.s32.totalorder %s117, %s118
      %p127 = scmp.eq.s32.totalorder %s23, 0
      %p128 = por %p126, %p127
      %p129 = scmp.ne.s32.totalorder %s117, %s118
      %p130 = scmp.eq.s32.totalorder %s24, 1
      %p131 = por %p129, %p130
      %p133 = scmp.ne.s32.totalorder %s118, %s132
      %p134 = scmp.eq.s32.totalorder %s24, 0
      %p135 = por %p133, %p134
      %s136 = ssub.s32 %s18, %s25
      %p137 = scmp.eq.s32.totalorder %s136, 0
      %s139 = sadd.s32 %s138, 1
      %s140 = scalar_select %p137, %s138, %s139
      %p143 = pneg %p137
      %p144 = scmp.eq.s32.totalorder %s18, 1
      %p145 = por %p143, %p144
      %p146 = scmp.ne.s32.totalorder %s138, %s141
      %p147 = scmp.eq.s32.totalorder %s18, 0
      %p148 = por %p146, %p147
      %p149 = scmp.ne.s32.totalorder %s138, %s141
      %p150 = scmp.eq.s32.totalorder %s23, 1
      %p151 = por %p149, %p150
      %p152 = scmp.ne.s32.totalorder %s141, %s142
      %p153 = scmp.eq.s32.totalorder %s23, 0
      %p154 = por %p152, %p153
      %p155 = scmp.ne.s32.totalorder %s141, %s142
      %p156 = scmp.eq.s32.totalorder %s24, 1
      %p157 = por %p155, %p156
      %p159 = scmp.ne.s32.totalorder %s142, %s158
      %p160 = scmp.eq.s32.totalorder %s24, 0
      %p161 = por %p159, %p160
      %p162 = scmp.le.s32.totalorder 1, %s18
      %p163 = scmp.lt.s32.totalorder %s18, 3
      %p164 = pnand %p162, %p163
      %p165 = pneg %p164
      // Predicated region
      $region9: #{tpu_custom_call.1} parent=5 // pred_check
        _
      $region10: #{tpu_custom_call.1} parent=5 // pred_check_branch
        %167 = sbr.rel (%p164) target = $region12
      $region11: #{tpu_custom_call.1} parent=5 // pred_region
        %s168 = ssub.s32 %s18, 1
        // Predicated region
        $region13: #{tpu_custom_call.1} parent=11 // pred_check
          %p169 = pneg %p65
        $region14: #{tpu_custom_call.1} parent=11 // pred_check_branch
          %171 = sbr.rel (%p169) target = $region16
        $region15: #{tpu_custom_call.1} parent=11 // pred_region
          %s173 = ssub.s32 2048, 2048
          %174 = vsyncadd [#allocation6], %s173
          %s175 = sshll.u32 [#allocation5], 4
          %s176 = int_to_ptr.vmem [resolvable:$true] %s175
          %181 = dma.hbm_to_vmem [thread:$0]  %s1, 2048, %s176, [#allocation6], 64, 64, 4
        $region16: #{tpu_custom_call.1} parent=11 // pred_fallthru
          _
        // Predicated region
        $region17: #{tpu_custom_call.1} parent=11 // pred_check
          %p182 = pneg %p86
        $region18: #{tpu_custom_call.1} parent=11 // pred_check_branch
          %184 = sbr.rel (%p182) target = $region20
        $region19: #{tpu_custom_call.1} parent=11 // pred_region
          _
        $region20: #{tpu_custom_call.1} parent=11 // pred_fallthru
          _
        // Predicated region
        $region21: #{tpu_custom_call.1} parent=11 // pred_check
          %p185 = pneg %p107
        $region22: #{tpu_custom_call.1} parent=11 // pred_check_branch
          %187 = sbr.rel (%p185) target = $region24
        $region23: #{tpu_custom_call.1} parent=11 // pred_region
          %s189 = ssub.s32 1024, 1024
          %190 = vsyncadd [#allocation6], %s189
          %s191 = sshll.u32 [#allocation7], 4
          %s192 = int_to_ptr.vmem [resolvable:$true] %s191
          %197 = dma.hbm_to_vmem [thread:$0]  %s3, 1024, %s192, [#allocation6], 64, 64, 4
        $region24: #{tpu_custom_call.1} parent=11 // pred_fallthru
          _
        // Predicated region
        $region25: #{tpu_custom_call.1} parent=11 // pred_check
          %p198 = pneg %p128
        $region26: #{tpu_custom_call.1} parent=11 // pred_check_branch
          %200 = sbr.rel (%p198) target = $region28
        $region27: #{tpu_custom_call.1} parent=11 // pred_region
          _
        $region28: #{tpu_custom_call.1} parent=11 // pred_fallthru
          _
      $region12: #{tpu_custom_call.1} parent=5 // pred_fallthru
        _
      %p201 = scmp.lt.s32.totalorder %s18, 2
      // Predicated region
      $region29: #{tpu_custom_call.1} parent=5 // pred_check
        %p202 = pneg %p201
      $region30: #{tpu_custom_call.1} parent=5 // pred_check_branch
        %204 = sbr.rel (%p202) target = $region32
      $region31: #{tpu_custom_call.1} parent=5 // pred_region
        // Predicated region
        $region33: #{tpu_custom_call.1} parent=31 // pred_check
          %p205 = pneg %p38
        $region34: #{tpu_custom_call.1} parent=31 // pred_check_branch
          %207 = sbr.rel (%p205) target = $region36
        $region35: #{tpu_custom_call.1} parent=31 // pred_region
          %s208 = sand.u32 %s28, 1
          %s209 = scalar_lea.sflag [#allocation3], %s208
          %s210 = sand.u32 %s28, 1
          %s211 = smul.addr %s210, 16
          %s212 = scalar_lea.vmem [#allocation2], %s211
          %s213 = smul.u32 2, %s18
          %s215 = ssub.s32 256, 256
          %216 = vsyncadd %s209, %s215
          %s217 = smul.addr %s213, 2
          %s218 = smul.addr %s217, 64
          %s219 = scalar_lea.hbm %s0, %s218
          %s220 = sshll.u32 %s212, 4
          %s221 = int_to_ptr.vmem [resolvable:$true] %s220
          %226 = dma.hbm_to_vmem [thread:$0]  %s219, 256, %s221, %s209, 128, 128, 8
        $region36: #{tpu_custom_call.1} parent=31 // pred_fallthru
          _
      $region32: #{tpu_custom_call.1} parent=5 // pred_fallthru
        _
      %p227 = scmp.le.s32.totalorder 1, %s18
      %p228 = scmp.lt.s32.totalorder %s18, 3
      %p229 = pnand %p227, %p228
      %p230 = pneg %p229
      // Predicated region
      $region37: #{tpu_custom_call.1} parent=5 // pred_check
        _
      $region38: #{tpu_custom_call.1} parent=5 // pred_check_branch
        %232 = sbr.rel (%p229) target = $region40
      $region39: #{tpu_custom_call.1} parent=5 // pred_region
        %s233 = ssub.s32 %s18, 1
        %s234 = sand.u32 %s31, 1
        %s235 = scalar_lea.sflag [#allocation3], %s234
        %s236 = sand.u32 %s31, 1
        %s237 = smul.addr %s236, 16
        %s238 = scalar_lea.vmem [#allocation2], %s237
        // Predicated region
        $region41: #{tpu_custom_call.1} parent=39 // pred_check
          %p239 = pneg %p44
        $region42: #{tpu_custom_call.1} parent=39 // pred_check_branch
          %241 = sbr.rel (%p239) target = $region44
        $region43: #{tpu_custom_call.1} parent=39 // pred_region
          %242 = dma.done %s235, 256
        $region44: #{tpu_custom_call.1} parent=39 // pred_fallthru
          _
        // Predicated region
        $region45: #{tpu_custom_call.1} parent=39 // pred_check
          %p243 = pneg %p65
        $region46: #{tpu_custom_call.1} parent=39 // pred_check_branch
          %245 = sbr.rel (%p243) target = $region48
        $region47: #{tpu_custom_call.1} parent=39 // pred_region
          %246 = dma.done [#allocation6], 2048
        $region48: #{tpu_custom_call.1} parent=39 // pred_fallthru
          _
        // Predicated region
        $region49: #{tpu_custom_call.1} parent=39 // pred_check
          %p247 = pneg %p107
        $region50: #{tpu_custom_call.1} parent=39 // pred_check_branch
          %249 = sbr.rel (%p247) target = $region52
        $region51: #{tpu_custom_call.1} parent=39 // pred_region
          %250 = dma.done [#allocation6], 1024
        $region52: #{tpu_custom_call.1} parent=39 // pred_fallthru
          _
        %s251 = sand.u32 %s31, 1
        %s252 = scalar_lea.sflag [#allocation3], %s251
        %s253 = sand.u32 %s31, 1
        %s254 = smul.addr %s253, 16
        %s255 = scalar_lea.vmem [#allocation2], %s254
        %p256 = pneg %p44
        %p257 = pneg %p41
        %p258 = pneg %p65
        %p259 = pneg %p62
        %p260 = pneg %p86
        %p261 = pneg %p83
        %p262 = pneg %p107
        %p263 = pneg %p104
        %p264 = pneg %p128
        %p265 = pneg %p125
        %p266 = pneg %p154
        %p267 = pneg %p151
        %s268 = sand.u32 %s141, 1
        %s269 = scalar_lea.sflag [#allocation4], %s268
        %s270 = sand.u32 %s141, 1
        %s271 = smul.addr %s270, 8
        %s272 = scalar_lea.vmem [#allocation8], %s271
        %s273 = smul.u32 2, %s23
        %s274 = smul.u32 2, %s23
        %v276 = vld [vmem:[%s238] sm:$0xff]
        %v277 = vld [vmem:[%s238 + $0x8] sm:$0xff]
        %v278 = vld [vmem:[#allocation5] sm:$0xf]
        %v279 = vld [vmem:[#allocation5 + $0x4] sm:$0xf]
        %v280 = vld [vmem:[#allocation5 + $0x8] sm:$0xf]
        %v281 = vld [vmem:[#allocation5 + $0xc] sm:$0xf]
        %v282 = vld [vmem:[#allocation5 + $0x10] sm:$0xf]
        %v283 = vld [vmem:[#allocation5 + $0x14] sm:$0xf]
        %v284 = vld [vmem:[#allocation5 + $0x18] sm:$0xf]
        %v285 = vld [vmem:[#allocation5 + $0x1c] sm:$0xf]
        %v286 = vld [vmem:[#allocation5 + $0x20] sm:$0xf]
        %v287 = vld [vmem:[#allocation5 + $0x24] sm:$0xf]
        %v288 = vld [vmem:[#allocation5 + $0x28] sm:$0xf]
        %v289 = vld [vmem:[#allocation5 + $0x2c] sm:$0xf]
        %v290 = vld [vmem:[#allocation5 + $0x30] sm:$0xf]
        %v291 = vld [vmem:[#allocation5 + $0x34] sm:$0xf]
        %v292 = vld [vmem:[#allocation5 + $0x38] sm:$0xf]
        %v293 = vld [vmem:[#allocation5 + $0x3c] sm:$0xf]
        %v294 = vld [vmem:[#allocation5 + $0x40] sm:$0xf]
        %v295 = vld [vmem:[#allocation5 + $0x44] sm:$0xf]
        %v296 = vld [vmem:[#allocation5 + $0x48] sm:$0xf]
        %v297 = vld [vmem:[#allocation5 + $0x4c] sm:$0xf]
        %v298 = vld [vmem:[#allocation5 + $0x50] sm:$0xf]
        %v299 = vld [vmem:[#allocation5 + $0x54] sm:$0xf]
        %v300 = vld [vmem:[#allocation5 + $0x58] sm:$0xf]
        %v301 = vld [vmem:[#allocation5 + $0x5c] sm:$0xf]
        %v302 = vld [vmem:[#allocation5 + $0x60] sm:$0xf]
        %v303 = vld [vmem:[#allocation5 + $0x64] sm:$0xf]
        %v304 = vld [vmem:[#allocation5 + $0x68] sm:$0xf]
        %v305 = vld [vmem:[#allocation5 + $0x6c] sm:$0xf]
        %v306 = vld [vmem:[#allocation5 + $0x70] sm:$0xf]
        %v307 = vld [vmem:[#allocation5 + $0x74] sm:$0xf]
        %v308 = vld [vmem:[#allocation5 + $0x78] sm:$0xf]
        %v309 = vld [vmem:[#allocation5 + $0x7c] sm:$0xf]
        %v310 = vld [vmem:[%s2] sm:$0x1]
        %v312 = vlaneseq
        %v313 = vshrl.u32 %v312, 7
        %v314 = vsub.s32 0, %v313
        %v315 = vrot.slane %v310, %v314
        %v319 = vunpack.c.l.b16 %v276
        %v320 = vunpack.c.h.b16 %v276
        %v321 = vunpack.c.l.b16 %v277
        %v322 = vunpack.c.h.b16 %v277
        %v323 = vpack.c.b16 %v321, %v319
        %v324 = vpack.c.b16 %v322, %v320
        %v359 = vunpack.c.l.b16 %v278
        %v360 = vunpack.c.l.b16 %v279
        %v361 = vunpack.c.l.b16 %v280
        %v362 = vunpack.c.l.b16 %v281
        %v363 = vunpack.c.l.b16 %v282
        %v364 = vunpack.c.l.b16 %v283
        %v365 = vunpack.c.l.b16 %v284
        %v366 = vunpack.c.l.b16 %v285
        %v367 = vunpack.c.l.b16 %v286
        %v368 = vunpack.c.l.b16 %v287
        %v369 = vunpack.c.l.b16 %v288
        %v370 = vunpack.c.l.b16 %v289
        %v371 = vunpack.c.l.b16 %v290
        %v372 = vunpack.c.l.b16 %v291
        %v373 = vunpack.c.l.b16 %v292
        %v374 = vunpack.c.l.b16 %v293
        %v375 = vunpack.c.l.b16 %v294
        %v376 = vunpack.c.l.b16 %v295
        %v377 = vunpack.c.l.b16 %v296
        %v378 = vunpack.c.l.b16 %v297
        %v379 = vunpack.c.l.b16 %v298
        %v380 = vunpack.c.l.b16 %v299
        %v381 = vunpack.c.l.b16 %v300
        %v382 = vunpack.c.l.b16 %v301
        %v383 = vunpack.c.l.b16 %v302
        %v384 = vunpack.c.l.b16 %v303
        %v385 = vunpack.c.l.b16 %v304
        %v386 = vunpack.c.l.b16 %v305
        %v387 = vunpack.c.l.b16 %v306
        %v388 = vunpack.c.l.b16 %v307
        %v389 = vunpack.c.l.b16 %v308
        %v390 = vunpack.c.l.b16 %v309
        %v391 = vpack.c.b16 %v360, %v359
        %v392 = vpack.c.b16 %v362, %v361
        %v393 = vpack.c.b16 %v364, %v363
        %v394 = vpack.c.b16 %v366, %v365
        %v395 = vpack.c.b16 %v368, %v367
        %v396 = vpack.c.b16 %v370, %v369
        %v397 = vpack.c.b16 %v372, %v371
        %v398 = vpack.c.b16 %v374, %v373
        %v399 = vpack.c.b16 %v376, %v375
        %v400 = vpack.c.b16 %v378, %v377
        %v401 = vpack.c.b16 %v380, %v379
        %v402 = vpack.c.b16 %v382, %v381
        %v403 = vpack.c.b16 %v384, %v383
        %v404 = vpack.c.b16 %v386, %v385
        %v405 = vpack.c.b16 %v388, %v387
        %v406 = vpack.c.b16 %v390, %v389
        %423 = vmatprep.subr.bf16.mxu0 0
        %424 = vmatpush1.bf16.msra.mxu0 %v391
        %425 = vmatprep.subr.bf16.mxu0 0
        %426 = vmatpush1.bf16.msra.mxu0 %v392
        %427 = vmatprep.subr.bf16.mxu0 0
        %428 = vmatpush1.bf16.msra.mxu0 %v393
        %429 = vmatprep.subr.bf16.mxu0 0
        %430 = vmatpush1.bf16.msra.mxu0 %v394
        %431 = vmatprep.subr.bf16.mxu0 0
        %432 = vmatpush1.bf16.msra.mxu0 %v395
        %433 = vmatprep.subr.bf16.mxu0 0
        %434 = vmatpush1.bf16.msra.mxu0 %v396
        %435 = vmatprep.subr.bf16.mxu0 0
        %436 = vmatpush1.bf16.msra.mxu0 %v397
        %437 = vmatprep.subr.bf16.mxu0 0
        %438 = vmatpush1.bf16.msra.mxu0 %v398
        %439 = vmatprep.subr.bf16.mxu0 0
        %440 = vmatpush1.bf16.msra.mxu0 %v399
        %441 = vmatprep.subr.bf16.mxu0 0
        %442 = vmatpush1.bf16.msra.mxu0 %v400
        %443 = vmatprep.subr.bf16.mxu0 0
        %444 = vmatpush1.bf16.msra.mxu0 %v401
        %445 = vmatprep.subr.bf16.mxu0 0
        %446 = vmatpush1.bf16.msra.mxu0 %v402
        %447 = vmatprep.subr.bf16.mxu0 0
        %448 = vmatpush1.bf16.msra.mxu0 %v403
        %449 = vmatprep.subr.bf16.mxu0 0
        %450 = vmatpush1.bf16.msra.mxu0 %v404
        %451 = vmatprep.subr.bf16.mxu0 0
        %452 = vmatpush1.bf16.msra.mxu0 %v405
        %453 = vmatprep.subr.bf16.mxu0 0
        %454 = vmatpush1.bf16.msra.mxu0 %v406
        %455 = vmatprep.mubr.bf16.mxu0 %v324
        %456 = vmatmul.mubr.bf16.gmra.mrb[0].mxu0 %v323
        %v457 = vpop.f32.mrb[0].mxu0
        %v458 = vadd.f32 %v315, %v457
        %v459 = vpop.f32.mrb[0].mxu0
        %v460 = vpop.f32.mrb[0].mxu0
        %v461 = vadd.f32 %v315, %v460
        %v462 = vpop.f32.mrb[0].mxu0
        %463 = vdwg.mxu0
        %v464 = vmax.f32 %v458, 0.0
        %v465 = vmax.f32 %v461, 0.0
        %v466 = vpack.c.bf16 %v465, %v464
        %v467 = vld [vmem:[#allocation7] sm:$0xf]
        %v468 = vld [vmem:[#allocation7 + $0x4] sm:$0xf]
        %v469 = vld [vmem:[#allocation7 + $0x8] sm:$0xf]
        %v470 = vld [vmem:[#allocation7 + $0xc] sm:$0xf]
        %v471 = vld [vmem:[#allocation7 + $0x10] sm:$0xf]
        %v472 = vld [vmem:[#allocation7 + $0x14] sm:$0xf]
        %v473 = vld [vmem:[#allocation7 + $0x18] sm:$0xf]
        %v474 = vld [vmem:[#allocation7 + $0x1c] sm:$0xf]
        %v475 = vld [vmem:[#allocation7 + $0x20] sm:$0xf]
        %v476 = vld [vmem:[#allocation7 + $0x24] sm:$0xf]
        %v477 = vld [vmem:[#allocation7 + $0x28] sm:$0xf]
        %v478 = vld [vmem:[#allocation7 + $0x2c] sm:$0xf]
        %v479 = vld [vmem:[#allocation7 + $0x30] sm:$0xf]
        %v480 = vld [vmem:[#allocation7 + $0x34] sm:$0xf]
        %v481 = vld [vmem:[#allocation7 + $0x38] sm:$0xf]
        %v482 = vld [vmem:[#allocation7 + $0x3c] sm:$0xf]
        %v483 = vld [vmem:[%s4] sm:$0x1]
        %v485 = vlaneseq
        %v486 = vshrl.u32 %v485, 7
        %v487 = vsub.s32 0, %v486
        %v488 = vrot.slane %v483, %v487
        %v506 = vunpack.c.l.b16 %v467
        %v507 = vunpack.c.l.b16 %v468
        %v508 = vunpack.c.l.b16 %v469
        %v509 = vunpack.c.l.b16 %v470
        %v510 = vunpack.c.l.b16 %v471
        %v511 = vunpack.c.l.b16 %v472
        %v512 = vunpack.c.l.b16 %v473
        %v513 = vunpack.c.l.b16 %v474
        %v514 = vunpack.c.l.b16 %v475
        %v515 = vunpack.c.l.b16 %v476
        %v516 = vunpack.c.l.b16 %v477
        %v517 = vunpack.c.l.b16 %v478
        %v518 = vunpack.c.l.b16 %v479
        %v519 = vunpack.c.l.b16 %v480
        %v520 = vunpack.c.l.b16 %v481
        %v521 = vunpack.c.l.b16 %v482
        %v522 = vpack.c.b16 %v507, %v506
        %v523 = vpack.c.b16 %v509, %v508
        %v524 = vpack.c.b16 %v511, %v510
        %v525 = vpack.c.b16 %v513, %v512
        %v526 = vpack.c.b16 %v515, %v514
        %v527 = vpack.c.b16 %v517, %v516
        %v528 = vpack.c.b16 %v519, %v518
        %v529 = vpack.c.b16 %v521, %v520
        %538 = vmatprep.subr.bf16.mxu0 0
        %539 = vmatpush1.bf16.msra.mxu0 %v522
        %540 = vmatprep.subr.bf16.mxu0 0
        %541 = vmatpush1.bf16.msra.mxu0 %v523
        %542 = vmatprep.subr.bf16.mxu0 0
        %543 = vmatpush1.bf16.msra.mxu0 %v524
        %544 = vmatprep.subr.bf16.mxu0 0
        %545 = vmatpush1.bf16.msra.mxu0 %v525
        %546 = vmatprep.subr.bf16.mxu0 0
        %547 = vmatpush1.bf16.msra.mxu0 %v526
        %548 = vmatprep.subr.bf16.mxu0 0
        %549 = vmatpush1.bf16.msra.mxu0 %v527
        %550 = vmatprep.subr.bf16.mxu0 0
        %551 = vmatpush1.bf16.msra.mxu0 %v528
        %552 = vmatprep.subr.bf16.mxu0 0
        %553 = vmatpush1.bf16.msra.mxu0 %v529
        %554 = vmatprep.subr.bf16.mxu0 0
        %555 = vmatpush1.bf16.msra.mxu0 0
        %556 = vmatprep.subr.bf16.mxu0 0
        %557 = vmatpush1.bf16.msra.mxu0 0
        %558 = vmatprep.subr.bf16.mxu0 0
        %559 = vmatpush1.bf16.msra.mxu0 0
        %560 = vmatprep.subr.bf16.mxu0 0
        %561 = vmatpush1.bf16.msra.mxu0 0
        %562 = vmatprep.subr.bf16.mxu0 0
        %563 = vmatpush1.bf16.msra.mxu0 0
        %564 = vmatprep.subr.bf16.mxu0 0
        %565 = vmatpush1.bf16.msra.mxu0 0
        %566 = vmatprep.subr.bf16.mxu0 0
        %567 = vmatpush1.bf16.msra.mxu0 0
        %568 = vmatprep.subr.bf16.mxu0 0
        %569 = vmatpush1.bf16.msra.mxu0 0
        %570 = vmatprep.mubr.bf16.mxu0 0
        %571 = vmatmul.mubr.bf16.gmra.mrb[0].mxu0 %v466
        %v572 = vpop.f32.mrb[0].mxu0
        %v573 = vadd.f32 %v488, %v572
        %v574 = vpop.f32.mrb[0].mxu0
        %v575 = vpop.f32.mrb[0].mxu0
        %v576 = vadd.f32 %v488, %v575
        %v577 = vpop.f32.mrb[0].mxu0
        %578 = vdwg.mxu0
        %v579 = vpack.c.bf16 %v576, %v573
        %v581 = vunpack.c.l.b16 %v579
        %v582 = vunpack.c.h.b16 %v579
        %v583 = vpack.c.b16 %v581, %v581
        %v584 = vpack.c.b16 %v582, %v582
        %587 = vst [vmem:[%s272] sm:$0xf] %v583
        %588 = vst [vmem:[%s272 + $0x4] sm:$0xf] %v584
        %s589 = sand.u32 %s141, 1
        %s590 = scalar_lea.sflag [#allocation4], %s589
        %s591 = sand.u32 %s141, 1
        %s592 = smul.addr %s591, 8
        %s593 = scalar_lea.vmem [#allocation8], %s592
        // Predicated region
        $region53: #{tpu_custom_call.1} parent=39 // pred_check
          %p594 = pneg %p151
        $region54: #{tpu_custom_call.1} parent=39 // pred_check_branch
          %596 = sbr.rel (%p594) target = $region56
        $region55: #{tpu_custom_call.1} parent=39 // pred_region
          %s597 = smul.u32 2, %s23
          %s599 = ssub.s32 128, 128
          %600 = vsyncadd %s590, %s599
          %s601 = smul.addr %s597, 64
          %s602 = scalar_lea.hbm %s5, %s601
          %s603 = sshll.u32 %s593, 4
          %s604 = int_to_ptr.vmem [resolvable:$true] %s603
          %609 = dma.vmem_to_hbm [thread:$0]  %s604, 128, %s602, %s590, 64, 64, 4
        $region56: #{tpu_custom_call.1} parent=39 // pred_fallthru
          _
      $region40: #{tpu_custom_call.1} parent=5 // pred_fallthru
        _
      %p610 = scmp.le.s32.totalorder 2, %s18
      // Predicated region
      $region57: #{tpu_custom_call.1} parent=5 // pred_check
        %p611 = pneg %p610
      $region58: #{tpu_custom_call.1} parent=5 // pred_check_branch
        %613 = sbr.rel (%p611) target = $region60
      $region59: #{tpu_custom_call.1} parent=5 // pred_region
        %s614 = ssub.s32 %s18, 2
        // Predicated region
        $region61: #{tpu_custom_call.1} parent=59 // pred_check
          %p615 = pneg %p157
        $region62: #{tpu_custom_call.1} parent=59 // pred_check_branch
          %617 = sbr.rel (%p615) target = $region64
        $region63: #{tpu_custom_call.1} parent=59 // pred_region
          %s618 = sand.u32 %s142, 1
          %s619 = scalar_lea.sflag [#allocation4], %s618
          %s620 = sand.u32 %s142, 1
          %s621 = smul.addr %s620, 8
          %s622 = scalar_lea.vmem [#allocation8], %s621
          %623 = dma.done %s619, 128
        $region64: #{tpu_custom_call.1} parent=59 // pred_fallthru
          _
      $region60: #{tpu_custom_call.1} parent=5 // pred_fallthru
        _
    $region6: #{tpu_custom_call.1} parent=1 // loop_footer
      %s22 = sadd.s32 1, %s18
    $region7: #{tpu_custom_call.1} parent=1 // loop_footer_branch
      %17 = sbr.rel target = $region3
    $region8: #{tpu_custom_call.1} parent=1 // loop_exit
      _
    %624 = vsyncpa [#allocation3], 1
    %s625 = scalar_lea.sflag [#allocation3], 1
    %626 = vsyncpa %s625, 1
    %627 = vsyncpa [#allocation6], 1
    %628 = vsyncpa [#allocation4], 1
    %s629 = scalar_lea.sflag [#allocation4], 1
    %630 = vsyncpa %s629, 1

</llo_original>
